<compile_context>
chip_gen: v7x
topology: tpu7x:2x2x1
jax: 0.10.0
libtpu: 0.0.40
codegen_flags: <defaults>
</compile_context>

<pallas_src>
import functools
import math

import jax
import jax.numpy as jnp
from jax import lax
from jax.experimental import pallas as pl
from jax.experimental.pallas import tpu as pltpu


def _round_up(x, m):
    return ((x + m - 1) // m) * m


def _vmem_budget_bytes():
    # Physical VMEM differs by generation (v5e/v6e: 128 MiB, v7x: 64 MiB/TC).
    # Budget ~75% of physical; tiles are sized to ~80% of that budget.
    cap = None
    try:
        cap = getattr(pltpu.get_tpu_info(), "vmem_capacity_bytes", None)
    except Exception:
        cap = None
    if not cap:
        cap = 64 * 1024 * 1024  # conservative (v7x-sized) default
    return int(cap) * 3 // 4


# ----------------------------------------------------------------------------
# Kernel 1: input projection for all timesteps:  (M, K) @ (K, 4H) + bias
# ----------------------------------------------------------------------------
def _proj_kernel(x_ref, w_ref, b_ref, o_ref):
    acc = jnp.dot(x_ref[...], w_ref[...], preferred_element_type=jnp.float32)
    o_ref[...] = (acc + b_ref[...]).astype(o_ref.dtype)


def _pick_m_tile(m, k, n, budget):
    # bf16: resident W (1 buf) + x tile (2 bufs) + out tile (2 bufs) + bias.
    usable = (budget * 4) // 5
    for tm in (1024, 512, 256, 128):
        if tm > m:
            continue
        need = 2 * k * n + 4 * tm * k + 4 * tm * n + 8 * n
        if need <= usable:
            return tm
    # TODO(synk): tile N=4H / add a K grid axis when the weight alone is huge.
    return m if m <= 128 else 128


def _input_projection(x2d, w_t, bias_row, budget):
    m, k = x2d.shape
    n = w_t.shape[1]
    tm = _pick_m_tile(m, k, n, budget)
    grid_m = pl.cdiv(m, tm)

    cost = pl.CostEstimate(
        flops=2 * m * k * n,
        transcendentals=0,
        bytes_accessed=2 * (m * k + k * n + m * n) + 4 * n,
    )

    return pl.pallas_call(
        _proj_kernel,
        out_shape=jax.ShapeDtypeStruct((m, n), jnp.bfloat16),
        grid_spec=pltpu.PrefetchScalarGridSpec(
            num_scalar_prefetch=0,
            grid=(grid_m,),
            in_specs=[
                pl.BlockSpec((tm, k), lambda i: (i, 0)),
                pl.BlockSpec((k, n), lambda i: (0, 0),
                             pipeline_mode=pl.Buffered(1)),   # resident W_ih^T
                pl.BlockSpec((1, n), lambda i: (0, 0),
                             pipeline_mode=pl.Buffered(1)),   # fused bias
            ],
            out_specs=pl.BlockSpec((tm, n), lambda i: (i, 0)),
        ),
        compiler_params=pltpu.CompilerParams(
            dimension_semantics=("parallel",),
            vmem_limit_bytes=budget,
        ),
        cost_estimate=cost,
    )(x2d, w_t, bias_row)


# ----------------------------------------------------------------------------
# Kernel 2: fused LSTM recurrence, grid over T-chunks, inner loop over steps
# ----------------------------------------------------------------------------
def _lstm_chunk_kernel(maxlen_ref, len_ref, xg_ref, whh_ref,
                       out_ref, hn_ref, cn_ref, h_sc, c_sc, *, hidden_p):
    c_idx = pl.program_id(0)
    t_chunk = xg_ref.shape[0]
    t0 = c_idx * t_chunk
    maxlen = maxlen_ref[0]

    @pl.when(c_idx == 0)
    def _():
        h_sc[...] = jnp.zeros_like(h_sc)
        c_sc[...] = jnp.zeros_like(c_sc)

    @pl.when(t0 < maxlen)
    def _():
        def step(tt, carry):
            t = t0 + tt
            h = h_sc[...]
            c = c_sc[...]
            # Single lane-dense (B, Hp) @ (Hp, 4Hp) matmul -> all 4 gates.
            gates = xg_ref[tt].astype(jnp.float32) + jnp.dot(
                h.astype(jnp.bfloat16), whh_ref[...],
                preferred_element_type=jnp.float32)
            i_g = jax.nn.sigmoid(gates[:, 0:hidden_p])
            f_g = jax.nn.sigmoid(gates[:, hidden_p:2 * hidden_p])
            g_g = jnp.tanh(gates[:, 2 * hidden_p:3 * hidden_p])
            o_g = jax.nn.sigmoid(gates[:, 3 * hidden_p:4 * hidden_p])

            c_new = f_g * c + i_g * g_g
            h_new = o_g * jnp.tanh(c_new)

            # Dynamic lengths: freeze state / zero output past each length
            # (matches pack_padded_sequence / pad_packed_sequence).
            valid = t < len_ref[...]                       # (B, 1) bool
            h_sc[...] = jnp.where(valid, h_new, h)
            c_sc[...] = jnp.where(valid, c_new, c)
            out_ref[tt] = jnp.where(valid, h_new, 0.0).astype(out_ref.dtype)
            return carry

        lax.fori_loop(0, t_chunk, step, 0, unroll=False)

    @pl.when(t0 >= maxlen)
    def _():
        # Whole chunk is past every sequence length: emit padding, skip math.
        out_ref[...] = jnp.zeros_like(out_ref)

    @pl.when(c_idx == pl.num_programs(0) - 1)
    def _():
        hn_ref[...] = h_sc[...].astype(hn_ref.dtype)
        cn_ref[...] = c_sc[...].astype(cn_ref.dtype)


def _pick_t_chunk(seq, b, h4, hp, budget):
    usable = (budget * 4) // 5
    # resident W_hh (1 buf, bf16) + lengths + hn/cn + h/c scratch
    base = 2 * hp * h4 + 8 * b + 6 * b * hp * 4
    for tc in (256, 128, 64, 32, 16, 8):
        if tc > seq:
            continue
        need = base + 4 * tc * b * h4 + 8 * tc * b * hp   # xg bf16 x2, out f32 x2
        if need <= usable:
            return tc
    return min(seq, 8)


def _recurrence(max_len, lengths_col, xg, w_hh_t, batch_p, seq, hidden_p, budget):
    h4 = 4 * hidden_p
    t_chunk = _pick_t_chunk(seq, batch_p, h4, hidden_p, budget)
    n_chunks = pl.cdiv(seq, t_chunk)

    cost = pl.CostEstimate(
        flops=2 * seq * batch_p * hidden_p * h4 + 10 * seq * batch_p * hidden_p,
        transcendentals=5 * seq * batch_p * hidden_p,
        bytes_accessed=(2 * seq * batch_p * h4 + 2 * hidden_p * h4
                        + 4 * seq * batch_p * hidden_p
                        + 8 * batch_p * hidden_p + 4 * batch_p + 4),
    )

    kernel = functools.partial(_lstm_chunk_kernel, hidden_p=hidden_p)

    out_shapes = (
        jax.ShapeDtypeStruct((seq, batch_p, hidden_p), jnp.float32),  # time-major
        jax.ShapeDtypeStruct((batch_p, hidden_p), jnp.float32),       # h_n
        jax.ShapeDtypeStruct((batch_p, hidden_p), jnp.float32),       # c_n
    )

    return pl.pallas_call(
        kernel,
        out_shape=out_shapes,
        grid_spec=pltpu.PrefetchScalarGridSpec(
            num_scalar_prefetch=1,                       # max_len -> SMEM
            grid=(n_chunks,),
            in_specs=[
                pl.BlockSpec((batch_p, 1), lambda c, ml: (0, 0),
                             pipeline_mode=pl.Buffered(1)),            # lengths
                pl.BlockSpec((t_chunk, batch_p, h4),
                             lambda c, ml: (c, 0, 0)),                 # xg chunk
                pl.BlockSpec((hidden_p, h4), lambda c, ml: (0, 0),
                             pipeline_mode=pl.Buffered(1)),            # W_hh^T
            ],
            out_specs=(
                pl.BlockSpec((t_chunk, batch_p, hidden_p), lambda c, ml: (c, 0, 0)),
                pl.BlockSpec((batch_p, hidden_p), lambda c, ml: (0, 0)),
                pl.BlockSpec((batch_p, hidden_p), lambda c, ml: (0, 0)),
            ),
            scratch_shapes=[
                pltpu.VMEM((batch_p, hidden_p), jnp.float32),  # h_t
                pltpu.VMEM((batch_p, hidden_p), jnp.float32),  # c_t
            ],
        ),
        compiler_params=pltpu.CompilerParams(
            dimension_semantics=("arbitrary",),            # sequential recurrence
            vmem_limit_bytes=budget,
        ),
        cost_estimate=cost,
    )(max_len, lengths_col, xg, w_hh_t)


# ----------------------------------------------------------------------------
# Wrapper: DynamicLSTM.forward semantics (batch_first=True)
# ----------------------------------------------------------------------------
def dynamic_lstm(x, w_ih, w_hh, b_ih, b_hh, seq_lengths=None):
    """x: (B, T, D). Weights in PyTorch nn.LSTM layout:
       w_ih (4H, D), w_hh (4H, H), b_ih (4H,), b_hh (4H,).
       Returns (output (B, T, H), (h_n (1, B, H), c_n (1, B, H)))."""
    batch, seq, in_dim = x.shape
    h4 = w_ih.shape[0]
    hidden = h4 // 4

    hidden_p = _round_up(hidden, 128)   # lane-dense gate slices & output
    batch_p = _round_up(batch, 8)       # sublane-dense state
    h4p = 4 * hidden_p
    budget = _vmem_budget_bytes()

    if seq_lengths is None:
        lengths = jnp.full((batch,), seq, dtype=jnp.int32)
    else:
        lengths = jnp.asarray(seq_lengths, dtype=jnp.int32)
    lengths_p = jnp.zeros((batch_p,), jnp.int32).at[:batch].set(lengths)
    max_len = jnp.max(lengths_p).reshape(1).astype(jnp.int32)
    lengths_col = lengths_p.reshape(batch_p, 1)

    # One-time weight prep: transpose to (K, 4H) and pad each gate's H slice
    # to the 128-lane boundary (zero padding -> padded channels stay 0).
    def _prep_w(w, k_in, k_pad):
        wg = w.reshape(4, hidden, k_in)                     # (gate, H_out, K)
        wg = jnp.transpose(wg, (0, 2, 1))                   # (gate, K, H_out)
        wg = jnp.pad(wg, ((0, 0), (0, k_pad - k_in), (0, hidden_p - hidden)))
        return jnp.transpose(wg, (1, 0, 2)).reshape(k_pad, h4p)

    w_ih_t = _prep_w(w_ih, in_dim, in_dim).astype(jnp.bfloat16)    # (D, 4Hp)
    w_hh_t = _prep_w(w_hh, hidden, hidden_p).astype(jnp.bfloat16)  # (Hp, 4Hp)

    bias = (b_ih + b_hh).reshape(4, hidden).astype(jnp.float32)
    bias = jnp.pad(bias, ((0, 0), (0, hidden_p - hidden))).reshape(1, h4p)

    # Time-major x; one big MXU projection for every timestep at once.
    # TODO(synk): fuse this transpose into the projection input DMA
    # (CompilerParams(allow_input_fusion)) instead of materializing it.
    x_tm = jnp.transpose(x, (1, 0, 2))                        # (T, B, D)
    x_tm = jnp.pad(x_tm, ((0, 0), (0, batch_p - batch), (0, 0)))
    x2d = x_tm.reshape(seq * batch_p, in_dim).astype(jnp.bfloat16)

    xg = _input_projection(x2d, w_ih_t, bias, budget)         # bf16 (T*Bp, 4Hp)
    xg = xg.reshape(seq, batch_p, h4p)

    out_tm, h_n, c_n = _recurrence(max_len, lengths_col, xg, w_hh_t,
                                   batch_p, seq, hidden_p, budget)

    output = jnp.transpose(out_tm, (1, 0, 2))[:batch, :, :hidden]
    h_n = h_n[:batch, :hidden][None]
    c_n = c_n[:batch, :hidden][None]
    return output, (h_n, c_n)


# ----------------------------------------------------------------------------
# Pure-JAX reference (torch nn.LSTM + packed-sequence semantics)
# ----------------------------------------------------------------------------
def lstm_reference(x, lengths, w_ih, w_hh, b_ih, b_hh):
    batch, seq, _ = x.shape
    hidden = w_hh.shape[1]
    h = jnp.zeros((batch, hidden), jnp.float32)
    c = jnp.zeros((batch, hidden), jnp.float32)
    outs = []
    for t in range(seq):
        gates = x[:, t, :] @ w_ih.T + b_ih + h @ w_hh.T + b_hh
        i = jax.nn.sigmoid(gates[:, 0:hidden])
        f = jax.nn.sigmoid(gates[:, hidden:2 * hidden])
        g = jnp.tanh(gates[:, 2 * hidden:3 * hidden])
        o = jax.nn.sigmoid(gates[:, 3 * hidden:4 * hidden])
        c_new = f * c + i * g
        h_new = o * jnp.tanh(c_new)
        valid = (t < lengths)[:, None]
        h = jnp.where(valid, h_new, h)
        c = jnp.where(valid, c_new, c)
        outs.append(jnp.where(valid, h_new, 0.0))
    out = jnp.stack(outs, axis=1)
    return out, h[None], c[None]


if __name__ == "__main__":
    key = jax.random.PRNGKey(0)
    kx, kwi, kwh, kbi, kbh = jax.random.split(key, 5)

    batch, seq, input_size, hidden = 2, 8, 16, 32
    h4 = 4 * hidden

    x = jax.random.normal(kx, (batch, seq, input_size), dtype=jnp.float32)

    # torch.nn.LSTM default init: U(-1/sqrt(hidden), 1/sqrt(hidden))
    bound = 1.0 / math.sqrt(hidden)
    w_ih = jax.random.uniform(kwi, (h4, input_size), jnp.float32, -bound, bound)
    w_hh = jax.random.uniform(kwh, (h4, hidden), jnp.float32, -bound, bound)
    b_ih = jax.random.uniform(kbi, (h4,), jnp.float32, -bound, bound)
    b_hh = jax.random.uniform(kbh, (h4,), jnp.float32, -bound, bound)

    seq_lengths = jnp.array([8, 5], dtype=jnp.int32)  # descending, like packed

    # Dynamic-length path
    output, (h_n, c_n) = dynamic_lstm(x, w_ih, w_hh, b_ih, b_hh, seq_lengths)
    output = jax.block_until_ready(output)
    out_ref, h_ref, c_ref = lstm_reference(x, seq_lengths, w_ih, w_hh, b_ih, b_hh)

    assert output.shape == (batch, seq, hidden)
    assert h_n.shape == (1, batch, hidden) and c_n.shape == (1, batch, hidden)
    # bf16 MXU inputs (x, W_ih, W_hh, xg) vs. f32 reference -> looser tolerance.
    assert jnp.allclose(output, out_ref, atol=5e-2, rtol=5e-2)
    assert jnp.allclose(h_n, h_ref, atol=5e-2, rtol=5e-2)
    assert jnp.allclose(c_n, c_ref, atol=5e-2, rtol=5e-2)

    # No-lengths path (plain LSTM)
    out2, (h2, c2) = dynamic_lstm(x, w_ih, w_hh, b_ih, b_hh, None)
    out2 = jax.block_until_ready(out2)
    full = jnp.full((batch,), seq, dtype=jnp.int32)
    out_ref2, h_ref2, c_ref2 = lstm_reference(x, full, w_ih, w_hh, b_ih, b_hh)
    assert jnp.allclose(out2, out_ref2, atol=5e-2, rtol=5e-2)
    assert jnp.allclose(h2, h_ref2, atol=5e-2, rtol=5e-2)
    assert jnp.allclose(c2, c_ref2, atol=5e-2, rtol=5e-2)

    print("KERNEL_OK")
</pallas_src>

<mosaic_0001>
module attributes {stable_mosaic.version = 11 : i64} {
  func.func @_proj_kernel(%arg0: i32, %arg1: memref<64x16xbf16, #tpu.memory_space<vmem>>, %arg2: memref<16x512xbf16, #tpu.memory_space<vmem>>, %arg3: memref<1x512xf32, #tpu.memory_space<vmem>>, %arg4: memref<64x512xbf16, #tpu.memory_space<vmem>>) attributes {dimension_semantics = [#tpu.dimension_semantics<parallel>], iteration_bounds = array<i64: 1>, scalar_prefetch = 0 : i64, scratch_operands = 0 : i64, tpu.core_type = #tpu.core_type<tc>, window_params = [{transform_indices = @transform_0, window_bounds = array<i64: 64, 16>}, {pipeline_mode = #tpu.pipeline_mode<synchronous>, transform_indices = @transform_1, window_bounds = array<i64: 16, 512>}, {pipeline_mode = #tpu.pipeline_mode<synchronous>, transform_indices = @transform_2, window_bounds = array<i64: 1, 512>}, {transform_indices = @transform_3, window_bounds = array<i64: 64, 512>}]} {
    %c0 = arith.constant 0 : index
    %c0_0 = arith.constant 0 : index
    %0 = vector.load %arg1[%c0, %c0_0] : memref<64x16xbf16, #tpu.memory_space<vmem>>, vector<64x16xbf16>
    %c0_1 = arith.constant 0 : index
    %c0_2 = arith.constant 0 : index
    %1 = vector.load %arg2[%c0_1, %c0_2] : memref<16x512xbf16, #tpu.memory_space<vmem>>, vector<16x512xbf16>
    %cst = arith.constant dense<0.000000e+00> : vector<64x512xf32>
    %2 = tpu.matmul %0, %1, %cst {dimension_numbers = #tpu.dot_dimension_numbers<[1], [0], [0], [1], [0, 0, 1, 1], [], []>} : vector<64x16xbf16>, vector<16x512xbf16>, vector<64x512xf32> -> vector<64x512xf32>
    %c0_3 = arith.constant 0 : index
    %c0_4 = arith.constant 0 : index
    %3 = vector.load %arg3[%c0_3, %c0_4] : memref<1x512xf32, #tpu.memory_space<vmem>>, vector<1x512xf32>
    %4 = vector.broadcast %3 : vector<1x512xf32> to vector<64x512xf32>
    %5 = arith.addf %2, %4 : vector<64x512xf32>
    %6 = arith.truncf %5 : vector<64x512xf32> to vector<64x512xbf16>
    %c0_5 = arith.constant 0 : index
    %c0_6 = arith.constant 0 : index
    %7 = vector.load %arg4[%c0_5, %c0_6] : memref<64x512xbf16, #tpu.memory_space<vmem>>, vector<64x512xbf16>
    tpu.vector_store %arg4[%c0_5, %c0_6], %6 {strides = array<i32>} : memref<64x512xbf16, #tpu.memory_space<vmem>>, vector<64x512xbf16>,
    return
  }
  func.func @transform_0(%arg0: i32) -> (i32, i32) {
    %c0_i32 = arith.constant 0 : i32
    %c0_i32_0 = arith.constant 0 : i32
    return %arg0, %c0_i32 : i32, i32
  }
  func.func @transform_1(%arg0: i32) -> (i32, i32) {
    %c0_i32 = arith.constant 0 : i32
    %c0_i32_0 = arith.constant 0 : i32
    %c0_i32_1 = arith.constant 0 : i32
    return %c0_i32, %c0_i32_0 : i32, i32
  }
  func.func @transform_2(%arg0: i32) -> (i32, i32) {
    %c0_i32 = arith.constant 0 : i32
    %c0_i32_0 = arith.constant 0 : i32
    %c0_i32_1 = arith.constant 0 : i32
    return %c0_i32, %c0_i32_0 : i32, i32
  }
  func.func @transform_3(%arg0: i32) -> (i32, i32) {
    %c0_i32 = arith.constant 0 : i32
    %c0_i32_0 = arith.constant 0 : i32
    return %arg0, %c0_i32 : i32, i32
  }
}

</mosaic_0001>

<llo_original>
// kernel: tpu_custom_call.1
$region0: #{tpu_custom_call.1}
  #allocation0 [shape = 'u32[]', space=smem, size = 0x4, offset = 0x4, fixed_abs, tag = 'smem constant byte address 0x4 - core index']
  #allocation1 [shape = 'u32[144,128]{1,0:T(1,128)}', space=vmem, size = 0x12000, scoped, tag = 'internal scratch']
  %s0 = inlined_call_operand.vmem [shape: bf16[64,16], index: 0, kind: input, shape index: {}]
  %s1 = inlined_call_operand.vmem [shape: bf16[16,512], index: 1, kind: input, shape index: {}]
  %s2 = inlined_call_operand.vmem [shape: f32[1,512], index: 2, kind: input, shape index: {}]
  %s3 = inlined_call_operand.hbm [shape: bf16[64,512], index: 3, kind: output, shape index: {}]
  %s4 = sld [smem:[#allocation0]]
  $region22: #{tpu_custom_call.1} parent=0
    _
  %s6 = ssub.s32 1, %s4
  %s7 = scalar_select 0, %s6, %s4
  $region1: #{tpu_custom_call.1} parent=0
    #allocation2 [shape = 'u8[65536]{0}', space=vmem, size = 0x10000, scoped, tag = 'output window, operand 0, single buffered']
    #allocation3 [shape = 's32[1]{0}', space=sflag, size = 0x4, scoped, tag = 'scoped memory for tpu_custom_call.1']
    %8 = vsyncpa [#allocation3], 0
    // Predicated region
    $region2: #{tpu_custom_call.1} parent=1 // pred_check
      _
    $region3: #{tpu_custom_call.1} parent=1 // pred_check_branch
      %10 = sbr.rel (0) target = $region5
    $region4: #{tpu_custom_call.1} parent=1 // pred_region
      _
    $region5: #{tpu_custom_call.1} parent=1 // pred_fallthru
      _
    // Predicated region
    $region6: #{tpu_custom_call.1} parent=1 // pred_check
      _
    $region7: #{tpu_custom_call.1} parent=1 // pred_check_branch
      %12 = sbr.rel (0) target = $region9
    $region8: #{tpu_custom_call.1} parent=1 // pred_region
      _
    $region9: #{tpu_custom_call.1} parent=1 // pred_fallthru
      _
    // Predicated region
    $region10: #{tpu_custom_call.1} parent=1 // pred_check
      _
    $region11: #{tpu_custom_call.1} parent=1 // pred_check_branch
      %14 = sbr.rel (0) target = $region13
    $region12: #{tpu_custom_call.1} parent=1 // pred_region
      _
    $region13: #{tpu_custom_call.1} parent=1 // pred_fallthru
      _
    %v16 = vld [vmem:[%s0] sm:$0xf]
    %v17 = vld [vmem:[%s0 + $0x4] sm:$0xf]
    %v18 = vld [vmem:[%s0 + $0x8] sm:$0xf]
    %v19 = vld [vmem:[%s0 + $0xc] sm:$0xf]
    %v20 = vld [vmem:[%s0 + $0x10] sm:$0xf]
    %v21 = vld [vmem:[%s0 + $0x14] sm:$0xf]
    %v22 = vld [vmem:[%s0 + $0x18] sm:$0xf]
    %v23 = vld [vmem:[%s0 + $0x1c] sm:$0xf]
    %v24 = vld [vmem:[%s1] sm:$0xff]
    %v25 = vld [vmem:[%s1 + $0x8] sm:$0xff]
    %v26 = vld [vmem:[%s1 + $0x10] sm:$0xff]
    %v27 = vld [vmem:[%s1 + $0x18] sm:$0xff]
    %v28 = vld [vmem:[%s2] sm:$0xf]
    %v30 = vlaneseq
    %v31 = vshrl.u32 %v30, 7
    %v32 = vsub.s32 0, %v31
    %v33 = vrot.slane %v28, %v32
    %v34 = vlaneseq
    %v35 = vshrl.u32 %v34, 7
    %v36 = vsub.s32 1, %v35
    %v37 = vrot.slane %v28, %v36
    %v38 = vlaneseq
    %v39 = vshrl.u32 %v38, 7
    %v40 = vsub.s32 2, %v39
    %v41 = vrot.slane %v28, %v40
    %v42 = vlaneseq
    %v43 = vshrl.u32 %v42, 7
    %v44 = vsub.s32 3, %v43
    %v45 = vrot.slane %v28, %v44
    %v58 = vunpack.c.l.b16 %v16
    %v59 = vunpack.c.l.b16 %v17
    %v60 = vunpack.c.l.b16 %v18
    %v61 = vunpack.c.l.b16 %v19
    %v62 = vunpack.c.l.b16 %v20
    %v63 = vunpack.c.l.b16 %v21
    %v64 = vunpack.c.l.b16 %v22
    %v65 = vunpack.c.l.b16 %v23
    %v66 = vpack.c.b16 %v59, %v58
    %v67 = vpack.c.b16 %v61, %v60
    %v68 = vpack.c.b16 %v63, %v62
    %v69 = vpack.c.b16 %v65, %v64
    %v74 = vunpack.c.l.b16 %v24
    %v75 = vunpack.c.h.b16 %v24
    %v76 = vunpack.c.l.b16 %v25
    %v77 = vunpack.c.h.b16 %v25
    %v78 = vunpack.c.l.b16 %v26
    %v79 = vunpack.c.h.b16 %v26
    %v80 = vunpack.c.l.b16 %v27
    %v81 = vunpack.c.h.b16 %v27
    %v82 = vpack.c.b16 %v78, %v74
    %v83 = vpack.c.b16 %v79, %v75
    %v84 = vpack.c.b16 %v80, %v76
    %v85 = vpack.c.b16 %v81, %v77
    %vm90 = vcmask 130048
    %v92 = vsel %vm90, %v66, 0
    %v95 = vsel %vm90, %v67, 0
    %v98 = vsel %vm90, %v68, 0
    %v101 = vsel %vm90, %v69, 0
    %103 = vmatprep.subr.bf16.mxu0 %v83
    %104 = vmatpush1.bf16.msra.mxu0 %v82
    %105 = vmatprep.subr.bf16.mxu0 0
    %106 = vmatpush1.bf16.msra.mxu0 0
    %107 = vmatprep.subr.bf16.mxu0 0
    %108 = vmatpush1.bf16.msra.mxu0 0
    %109 = vmatprep.subr.bf16.mxu0 0
    %110 = vmatpush1.bf16.msra.mxu0 0
    %111 = vmatprep.subr.bf16.mxu0 0
    %112 = vmatpush1.bf16.msra.mxu0 0
    %113 = vmatprep.subr.bf16.mxu0 0
    %114 = vmatpush1.bf16.msra.mxu0 0
    %115 = vmatprep.subr.bf16.mxu0 0
    %116 = vmatpush1.bf16.msra.mxu0 0
    %117 = vmatprep.subr.bf16.mxu0 0
    %118 = vmatpush1.bf16.msra.mxu0 0
    %119 = vmatprep.subr.bf16.mxu0 0
    %120 = vmatpush1.bf16.msra.mxu0 0
    %121 = vmatprep.subr.bf16.mxu0 0
    %122 = vmatpush1.bf16.msra.mxu0 0
    %123 = vmatprep.subr.bf16.mxu0 0
    %124 = vmatpush1.bf16.msra.mxu0 0
    %125 = vmatprep.subr.bf16.mxu0 0
    %126 = vmatpush1.bf16.msra.mxu0 0
    %127 = vmatprep.subr.bf16.mxu0 0
    %128 = vmatpush1.bf16.msra.mxu0 0
    %129 = vmatprep.subr.bf16.mxu0 0
    %130 = vmatpush1.bf16.msra.mxu0 0
    %131 = vmatprep.subr.bf16.mxu0 0
    %132 = vmatpush1.bf16.msra.mxu0 0
    %133 = vmatprep.subr.bf16.mxu0 0
    %134 = vmatpush1.bf16.msra.mxu0 0
    %135 = vmatprep.mubr.bf16.mxu0 0
    %136 = vmatmul.mubr.bf16.gmra.mrb[0].mxu0 %v92
    %v137 = vpop.f32.mrb[0].mxu0
    %v138 = vadd.f32 %v33, %v137
    %v139 = vpop.f32.mrb[0].mxu0
    %v140 = vadd.f32 %v37, %v139
    %v141 = vpop.f32.mrb[0].mxu0
    %v142 = vadd.f32 %v33, %v141
    %v143 = vpop.f32.mrb[0].mxu0
    %v144 = vadd.f32 %v37, %v143
    %145 = vmatprep.mubr.bf16.mxu0 0
    %146 = vmatmul.mubr.bf16.gmra.mrb[0].mxu0 %v95
    %v147 = vpop.f32.mrb[0].mxu0
    %v148 = vadd.f32 %v33, %v147
    %v149 = vpop.f32.mrb[0].mxu0
    %v150 = vadd.f32 %v37, %v149
    %v151 = vpop.f32.mrb[0].mxu0
    %v152 = vadd.f32 %v33, %v151
    %v153 = vpop.f32.mrb[0].mxu0
    %v154 = vadd.f32 %v37, %v153
    %155 = vmatprep.mubr.bf16.mxu0 0
    %156 = vmatmul.mubr.bf16.gmra.mrb[0].mxu0 %v98
    %v157 = vpop.f32.mrb[0].mxu0
    %v158 = vadd.f32 %v33, %v157
    %v159 = vpop.f32.mrb[0].mxu0
    %v160 = vadd.f32 %v37, %v159
    %v161 = vpop.f32.mrb[0].mxu0
    %v162 = vadd.f32 %v33, %v161
    %v163 = vpop.f32.mrb[0].mxu0
    %v164 = vadd.f32 %v37, %v163
    %165 = vmatprep.mubr.bf16.mxu0 0
    %166 = vmatmul.mubr.bf16.gmra.mrb[0].mxu0 %v101
    %v167 = vpop.f32.mrb[0].mxu0
    %v168 = vadd.f32 %v33, %v167
    %v169 = vpop.f32.mrb[0].mxu0
    %v170 = vadd.f32 %v37, %v169
    %v171 = vpop.f32.mrb[0].mxu0
    %v172 = vadd.f32 %v33, %v171
    %v173 = vpop.f32.mrb[0].mxu0
    %v174 = vadd.f32 %v37, %v173
    %175 = vdwg.mxu0
    %176 = vmatprep.subr.bf16.mxu0 %v85
    %177 = vmatpush1.bf16.msra.mxu0 %v84
    %178 = vmatprep.subr.bf16.mxu0 0
    %179 = vmatpush1.bf16.msra.mxu0 0
    %180 = vmatprep.subr.bf16.mxu0 0
    %181 = vmatpush1.bf16.msra.mxu0 0
    %182 = vmatprep.subr.bf16.mxu0 0
    %183 = vmatpush1.bf16.msra.mxu0 0
    %184 = vmatprep.subr.bf16.mxu0 0
    %185 = vmatpush1.bf16.msra.mxu0 0
    %186 = vmatprep.subr.bf16.mxu0 0
    %187 = vmatpush1.bf16.msra.mxu0 0
    %188 = vmatprep.subr.bf16.mxu0 0
    %189 = vmatpush1.bf16.msra.mxu0 0
    %190 = vmatprep.subr.bf16.mxu0 0
    %191 = vmatpush1.bf16.msra.mxu0 0
    %192 = vmatprep.subr.bf16.mxu0 0
    %193 = vmatpush1.bf16.msra.mxu0 0
    %194 = vmatprep.subr.bf16.mxu0 0
    %195 = vmatpush1.bf16.msra.mxu0 0
    %196 = vmatprep.subr.bf16.mxu0 0
    %197 = vmatpush1.bf16.msra.mxu0 0
    %198 = vmatprep.subr.bf16.mxu0 0
    %199 = vmatpush1.bf16.msra.mxu0 0
    %200 = vmatprep.subr.bf16.mxu0 0
    %201 = vmatpush1.bf16.msra.mxu0 0
    %202 = vmatprep.subr.bf16.mxu0 0
    %203 = vmatpush1.bf16.msra.mxu0 0
    %204 = vmatprep.subr.bf16.mxu0 0
    %205 = vmatpush1.bf16.msra.mxu0 0
    %206 = vmatprep.subr.bf16.mxu0 0
    %207 = vmatpush1.bf16.msra.mxu0 0
    %208 = vmatprep.mubr.bf16.mxu0 0
    %209 = vmatmul.mubr.bf16.gmra.mrb[0].mxu0 %v92
    %v210 = vpop.f32.mrb[0].mxu0
    %v211 = vadd.f32 %v41, %v210
    %v212 = vpop.f32.mrb[0].mxu0
    %v213 = vadd.f32 %v45, %v212
    %v214 = vpop.f32.mrb[0].mxu0
    %v215 = vadd.f32 %v41, %v214
    %v216 = vpop.f32.mrb[0].mxu0
    %v217 = vadd.f32 %v45, %v216
    %218 = vmatprep.mubr.bf16.mxu0 0
    %219 = vmatmul.mubr.bf16.gmra.mrb[0].mxu0 %v95
    %v220 = vpop.f32.mrb[0].mxu0
    %v221 = vadd.f32 %v41, %v220
    %v222 = vpop.f32.mrb[0].mxu0
    %v223 = vadd.f32 %v45, %v222
    %v224 = vpop.f32.mrb[0].mxu0
    %v225 = vadd.f32 %v41, %v224
    %v226 = vpop.f32.mrb[0].mxu0
    %v227 = vadd.f32 %v45, %v226
    %228 = vmatprep.mubr.bf16.mxu0 0
    %229 = vmatmul.mubr.bf16.gmra.mrb[0].mxu0 %v98
    %v230 = vpop.f32.mrb[0].mxu0
    %v231 = vadd.f32 %v41, %v230
    %v232 = vpop.f32.mrb[0].mxu0
    %v233 = vadd.f32 %v45, %v232
    %v234 = vpop.f32.mrb[0].mxu0
    %v235 = vadd.f32 %v41, %v234
    %v236 = vpop.f32.mrb[0].mxu0
    %v237 = vadd.f32 %v45, %v236
    %238 = vmatprep.mubr.bf16.mxu0 0
    %239 = vmatmul.mubr.bf16.gmra.mrb[0].mxu0 %v101
    %v240 = vpop.f32.mrb[0].mxu0
    %v241 = vadd.f32 %v41, %v240
    %v242 = vpop.f32.mrb[0].mxu0
    %v243 = vadd.f32 %v45, %v242
    %v244 = vpop.f32.mrb[0].mxu0
    %v245 = vadd.f32 %v41, %v244
    %v246 = vpop.f32.mrb[0].mxu0
    %v247 = vadd.f32 %v45, %v246
    %248 = vdwg.mxu0
    %v249 = vpack.c.bf16 %v142, %v138
    %v250 = vpack.c.bf16 %v144, %v140
    %v251 = vpack.c.bf16 %v215, %v211
    %v252 = vpack.c.bf16 %v217, %v213
    %v253 = vpack.c.bf16 %v152, %v148
    %v254 = vpack.c.bf16 %v154, %v150
    %v255 = vpack.c.bf16 %v225, %v221
    %v256 = vpack.c.bf16 %v227, %v223
    %v257 = vpack.c.bf16 %v162, %v158
    %v258 = vpack.c.bf16 %v164, %v160
    %v259 = vpack.c.bf16 %v235, %v231
    %v260 = vpack.c.bf16 %v237, %v233
    %v261 = vpack.c.bf16 %v172, %v168
    %v262 = vpack.c.bf16 %v174, %v170
    %v263 = vpack.c.bf16 %v245, %v241
    %v264 = vpack.c.bf16 %v247, %v243
    %v281 = vunpack.c.l.b16 %v249
    %v282 = vunpack.c.l.b16 %v250
    %v283 = vunpack.c.l.b16 %v251
    %v284 = vunpack.c.l.b16 %v252
    %v285 = vunpack.c.h.b16 %v249
    %v286 = vunpack.c.h.b16 %v250
    %v287 = vunpack.c.h.b16 %v251
    %v288 = vunpack.c.h.b16 %v252
    %v289 = vunpack.c.l.b16 %v253
    %v290 = vunpack.c.l.b16 %v254
    %v291 = vunpack.c.l.b16 %v255
    %v292 = vunpack.c.l.b16 %v256
    %v293 = vunpack.c.h.b16 %v253
    %v294 = vunpack.c.h.b16 %v254
    %v295 = vunpack.c.h.b16 %v255
    %v296 = vunpack.c.h.b16 %v256
    %v297 = vunpack.c.l.b16 %v257
    %v298 = vunpack.c.l.b16 %v258
    %v299 = vunpack.c.l.b16 %v259
    %v300 = vunpack.c.l.b16 %v260
    %v301 = vunpack.c.h.b16 %v257
    %v302 = vunpack.c.h.b16 %v258
    %v303 = vunpack.c.h.b16 %v259
    %v304 = vunpack.c.h.b16 %v260
    %v305 = vunpack.c.l.b16 %v261
    %v306 = vunpack.c.l.b16 %v262
    %v307 = vunpack.c.l.b16 %v263
    %v308 = vunpack.c.l.b16 %v264
    %v309 = vunpack.c.h.b16 %v261
    %v310 = vunpack.c.h.b16 %v262
    %v311 = vunpack.c.h.b16 %v263
    %v312 = vunpack.c.h.b16 %v264
    %v313 = vpack.c.b16 %v282, %v281
    %v314 = vpack.c.b16 %v284, %v283
    %v315 = vpack.c.b16 %v286, %v285
    %v316 = vpack.c.b16 %v288, %v287
    %v317 = vpack.c.b16 %v290, %v289
    %v318 = vpack.c.b16 %v292, %v291
    %v319 = vpack.c.b16 %v294, %v293
    %v320 = vpack.c.b16 %v296, %v295
    %v321 = vpack.c.b16 %v298, %v297
    %v322 = vpack.c.b16 %v300, %v299
    %v323 = vpack.c.b16 %v302, %v301
    %v324 = vpack.c.b16 %v304, %v303
    %v325 = vpack.c.b16 %v306, %v305
    %v326 = vpack.c.b16 %v308, %v307
    %v327 = vpack.c.b16 %v310, %v309
    %v328 = vpack.c.b16 %v312, %v311
    %345 = vst [vmem:[#allocation2] sm:$0xff] %v313
    %346 = vst [vmem:[#allocation2 + $0x8] sm:$0xff] %v314
    %347 = vst [vmem:[#allocation2 + $0x10] sm:$0xff] %v315
    %348 = vst [vmem:[#allocation2 + $0x18] sm:$0xff] %v316
    %349 = vst [vmem:[#allocation2 + $0x20] sm:$0xff] %v317
    %350 = vst [vmem:[#allocation2 + $0x28] sm:$0xff] %v318
    %351 = vst [vmem:[#allocation2 + $0x30] sm:$0xff] %v319
    %352 = vst [vmem:[#allocation2 + $0x38] sm:$0xff] %v320
    %353 = vst [vmem:[#allocation2 + $0x40] sm:$0xff] %v321
    %354 = vst [vmem:[#allocation2 + $0x48] sm:$0xff] %v322
    %355 = vst [vmem:[#allocation2 + $0x50] sm:$0xff] %v323
    %356 = vst [vmem:[#allocation2 + $0x58] sm:$0xff] %v324
    %357 = vst [vmem:[#allocation2 + $0x60] sm:$0xff] %v325
    %358 = vst [vmem:[#allocation2 + $0x68] sm:$0xff] %v326
    %359 = vst [vmem:[#allocation2 + $0x70] sm:$0xff] %v327
    %360 = vst [vmem:[#allocation2 + $0x78] sm:$0xff] %v328
    // Predicated region
    $region14: #{tpu_custom_call.1} parent=1 // pred_check
      _
    $region15: #{tpu_custom_call.1} parent=1 // pred_check_branch
      %362 = sbr.rel (0) target = $region17
    $region16: #{tpu_custom_call.1} parent=1 // pred_region
      %s364 = ssub.s32 2048, 2048
      %365 = vsyncadd [#allocation3], %s364
      %s366 = sshll.u32 [#allocation2], 4
      %s367 = int_to_ptr.vmem [resolvable:$true] %s366
      %372 = dma.vmem_to_hbm [thread:$0]  %s367, 2048, %s3, [#allocation3], 256, 256, 16
    $region17: #{tpu_custom_call.1} parent=1 // pred_fallthru
      _
    // Predicated region
    $region18: #{tpu_custom_call.1} parent=1 // pred_check
      _
    $region19: #{tpu_custom_call.1} parent=1 // pred_check_branch
      %374 = sbr.rel (0) target = $region21
    $region20: #{tpu_custom_call.1} parent=1 // pred_region
      %375 = dma.done [#allocation3], 2048
    $region21: #{tpu_custom_call.1} parent=1 // pred_fallthru
      _
    %376 = vsyncpa [#allocation3], 1

</llo_original>
